<compile_context>
chip_gen: v5e
topology: v5e:2x2
jax: 0.10.0
libtpu: 0.0.40
codegen_flags: <defaults>
</compile_context>

<pallas_src>
import jax
import jax.numpy as jnp
from jax import lax
from jax.experimental import pallas as pl
from jax.experimental.pallas import tpu as pltpu


def _round_up(n, m):
    return ((n + m - 1) // m) * m


def _pad2d(m, rows, cols):
    return jnp.pad(m, ((0, rows - m.shape[0]), (0, cols - m.shape[1])))


def _critic_kernel(xa_ref,
                   w1_ref, b1_ref,
                   w2_ref, b2_ref,
                   w3_ref, b3_ref,
                   wo_ref,
                   out_ref):
    wdt = w2_ref.dtype  # matmul operand dtype (bf16 or f32)

    # fc1 (+ bias + ReLU); accumulate in f32, bias/ReLU on the VPU in f32.
    h = jnp.dot(xa_ref[...], w1_ref[...], preferred_element_type=jnp.float32)
    h = jnp.maximum(h + b1_ref[...], 0.0)

    # fc2 + relu
    h = jnp.dot(h.astype(wdt), w2_ref[...], preferred_element_type=jnp.float32)
    h = jnp.maximum(h + b2_ref[...], 0.0)

    # fc3 + relu
    h = jnp.dot(h.astype(wdt), w3_ref[...], preferred_element_type=jnp.float32)
    h = jnp.maximum(h + b3_ref[...], 0.0)

    # Output head, lane-dense: (1, H3p) x (tb, H3p)^T -> (1, tb); batch on lanes.
    q = lax.dot_general(wo_ref[...], h.astype(wdt),
                        (((1,), (1,)), ((), ())),
                        preferred_element_type=jnp.float32)
    out_ref[...] = q.astype(out_ref.dtype)


def prepare_critic_params(params, *, compute_dtype=jnp.bfloat16):
    """One-time weight prep: pad hidden dims to 128 lanes, cast matmul operands.

    Call this once when the parameters are created/updated, not per forward.
    Zero padding is inert through matmul / bias / ReLU / head.
    """
    w1, b1, w2, b2, w3, b3, wo, bo = params  # (in, out) weights, (1, out) biases
    d_in, H1 = w1.shape
    H2, H3 = w2.shape[1], w3.shape[1]
    H1p, H2p, H3p = (_round_up(h, 128) for h in (H1, H2, H3))

    return {
        "d_in": d_in,
        "w1": _pad2d(w1, d_in, H1p).astype(compute_dtype),
        "b1": _pad2d(b1, 1, H1p).astype(jnp.float32),
        "w2": _pad2d(w2, H1p, H2p).astype(compute_dtype),
        "b2": _pad2d(b2, 1, H2p).astype(jnp.float32),
        "w3": _pad2d(w3, H2p, H3p).astype(compute_dtype),
        "b3": _pad2d(b3, 1, H3p).astype(jnp.float32),
        "wo": _pad2d(wo.T, 1, H3p).astype(compute_dtype),   # (1, H3p) row, lane-dense head
        "bo": bo.reshape(1, 1).astype(jnp.float32),         # added in the wrapper
    }


def critic_forward(x, a, prepared, *, block_b=2048):
    """x: (B, n_states + n_goals), a: (B, action_size) -> (B, 1) float32.

    `prepared` is the output of prepare_critic_params().
    """
    B = x.shape[0]
    cd = prepared["w1"].dtype
    d_in = prepared["d_in"]
    H1p = prepared["w1"].shape[1]
    H2p = prepared["w2"].shape[1]
    H3p = prepared["w3"].shape[1]

    # Fused at the wrapper level: one (B, d_in) input, one fc1 matmul.
    xa = jnp.concatenate([x, a], axis=-1).astype(cd)
    assert xa.shape[1] == d_in

    # Batch tiling: lane-dense output blocks (multiple of 128 rows).  Keep at
    # least ~8 grid steps for moderate batches (megacore / v7x 2-TC sharding),
    # cap at block_b for large batches to amortize per-step overhead.
    tb = min(_round_up(block_b, 128), max(128, _round_up(pl.cdiv(B, 8), 128)))
    b_pad = _round_up(B, tb)
    if b_pad != B:
        xa = jnp.pad(xa, ((0, b_pad - B), (0, 0)))
    grid = (b_pad // tb,)

    def tile_map(i):
        return (i, 0)

    def resident(i):  # constant block index -> weights stay VMEM-resident
        return (0, 0)

    in_specs = [
        pl.BlockSpec((tb, d_in), tile_map),
        pl.BlockSpec((d_in, H1p), resident),
        pl.BlockSpec((1, H1p), resident),
        pl.BlockSpec((H1p, H2p), resident),
        pl.BlockSpec((1, H2p), resident),
        pl.BlockSpec((H2p, H3p), resident),
        pl.BlockSpec((1, H3p), resident),
        pl.BlockSpec((1, H3p), resident),
    ]
    out_specs = pl.BlockSpec((1, tb), lambda i: (0, i))

    q = pl.pallas_call(
        _critic_kernel,
        out_shape=jax.ShapeDtypeStruct((1, b_pad), jnp.float32),
        grid=grid,
        in_specs=in_specs,
        out_specs=out_specs,
        compiler_params=pltpu.CompilerParams(
            dimension_semantics=("parallel",)),
    )(xa, prepared["w1"], prepared["b1"], prepared["w2"], prepared["b2"],
      prepared["w3"], prepared["b3"], prepared["wo"])

    # Scalar output bias added here (cheaper than a (1,1) VMEM stream).
    return q[0, :B].reshape(B, 1) + prepared["bo"]


def init_critic_params(key, n_states, n_goals, action_size=1,
                       n_hidden1=32, n_hidden2=32, n_hidden3=32,
                       dtype=jnp.float32):
    """Init mimicking PyTorch nn.Linear default (U(-1/sqrt(fan_in), +)).

    Weights stored pre-transposed to (in_features, out_features); biases (1, out).
    """
    d_in = n_states + n_goals + action_size
    dims = [(d_in, n_hidden1), (n_hidden1, n_hidden2),
            (n_hidden2, n_hidden3), (n_hidden3, 1)]
    params = []
    for (fan_in, fan_out) in dims:
        key, kw, kb = jax.random.split(key, 3)
        bound = 1.0 / jnp.sqrt(jnp.asarray(fan_in, dtype))
        w = jax.random.uniform(kw, (fan_in, fan_out), dtype, -bound, bound)
        b = jax.random.uniform(kb, (1, fan_out), dtype, -bound, bound)
        params += [w, b]
    return tuple(params)


def critic_reference(x, a, params, compute_dtype=jnp.float32):
    """Pure-JAX reference of the PyTorch forward, optionally with bf16 matmul
    operands (to match the kernel's compute path)."""
    w1, b1, w2, b2, w3, b3, wo, bo = params
    cd = compute_dtype
    h = jnp.concatenate([x, a], axis=-1).astype(cd)
    h = jnp.maximum(jnp.dot(h, w1.astype(cd),
                            preferred_element_type=jnp.float32) + b1, 0.0)
    h = jnp.maximum(jnp.dot(h.astype(cd), w2.astype(cd),
                            preferred_element_type=jnp.float32) + b2, 0.0)
    h = jnp.maximum(jnp.dot(h.astype(cd), w3.astype(cd),
                            preferred_element_type=jnp.float32) + b3, 0.0)
    return jnp.dot(h.astype(cd), wo.astype(cd),
                   preferred_element_type=jnp.float32) + bo


if __name__ == "__main__":
    # Small synthetic problem: n_states=[10], n_goals=5, action_size=1 -> d_in=16
    n_states, n_goals, action_size = 10, 5, 1
    n_hidden = 32
    batch = 8

    key = jax.random.PRNGKey(0)
    key, kx, ka = jax.random.split(key, 3)
    x = jax.random.normal(kx, (batch, n_states + n_goals), jnp.float32)
    a = jax.random.normal(ka, (batch, action_size), jnp.float32)

    params = init_critic_params(key, n_states, n_goals, action_size,
                                n_hidden1=n_hidden, n_hidden2=n_hidden,
                                n_hidden3=n_hidden)

    # 1) Default bf16-operand path, compared against a bf16-operand reference.
    prep_bf16 = prepare_critic_params(params, compute_dtype=jnp.bfloat16)
    out_bf16 = jax.block_until_ready(critic_forward(x, a, prep_bf16))
    ref_bf16 = critic_reference(x, a, params, compute_dtype=jnp.bfloat16)
    assert out_bf16.shape == (batch, 1), out_bf16.shape
    assert jnp.allclose(out_bf16, ref_bf16, atol=1e-3, rtol=1e-3), \
        f"bf16 max err {jnp.max(jnp.abs(out_bf16 - ref_bf16))}"

    # 2) f32 path, compared against the exact PyTorch-semantics reference.
    prep_f32 = prepare_critic_params(params, compute_dtype=jnp.float32)
    out_f32 = jax.block_until_ready(critic_forward(x, a, prep_f32))
    ref_f32 = critic_reference(x, a, params, compute_dtype=jnp.float32)
    assert out_f32.shape == (batch, 1), out_f32.shape
    assert jnp.allclose(out_f32, ref_f32, atol=1e-5, rtol=1e-5), \
        f"f32 max err {jnp.max(jnp.abs(out_f32 - ref_f32))}"

    print("KERNEL_OK")
</pallas_src>

<mosaic_0001>
module attributes {stable_mosaic.version = 11 : i64} {
  func.func @_critic_kernel(%arg0: i32, %arg1: memref<128x16xbf16, #tpu.memory_space<vmem>>, %arg2: memref<16x128xbf16, #tpu.memory_space<vmem>>, %arg3: memref<1x128xf32, #tpu.memory_space<vmem>>, %arg4: memref<128x128xbf16, #tpu.memory_space<vmem>>, %arg5: memref<1x128xf32, #tpu.memory_space<vmem>>, %arg6: memref<128x128xbf16, #tpu.memory_space<vmem>>, %arg7: memref<1x128xf32, #tpu.memory_space<vmem>>, %arg8: memref<1x128xbf16, #tpu.memory_space<vmem>>, %arg9: memref<1x128xf32, #tpu.memory_space<vmem>>) attributes {dimension_semantics = [#tpu.dimension_semantics<parallel>], iteration_bounds = array<i64: 1>, scalar_prefetch = 0 : i64, scratch_operands = 0 : i64, tpu.core_type = #tpu.core_type<tc>, window_params = [{transform_indices = @transform_0, window_bounds = array<i64: 128, 16>}, {pipeline_mode = #tpu.pipeline_mode<synchronous>, transform_indices = @transform_1, window_bounds = array<i64: 16, 128>}, {pipeline_mode = #tpu.pipeline_mode<synchronous>, transform_indices = @transform_2, window_bounds = array<i64: 1, 128>}, {pipeline_mode = #tpu.pipeline_mode<synchronous>, transform_indices = @transform_3, window_bounds = array<i64: 128, 128>}, {pipeline_mode = #tpu.pipeline_mode<synchronous>, transform_indices = @transform_4, window_bounds = array<i64: 1, 128>}, {pipeline_mode = #tpu.pipeline_mode<synchronous>, transform_indices = @transform_5, window_bounds = array<i64: 128, 128>}, {pipeline_mode = #tpu.pipeline_mode<synchronous>, transform_indices = @transform_6, window_bounds = array<i64: 1, 128>}, {pipeline_mode = #tpu.pipeline_mode<synchronous>, transform_indices = @transform_7, window_bounds = array<i64: 1, 128>}, {transform_indices = @transform_8, window_bounds = array<i64: 1, 128>}]} {
    %c0 = arith.constant 0 : index
    %c0_0 = arith.constant 0 : index
    %0 = vector.load %arg1[%c0, %c0_0] : memref<128x16xbf16, #tpu.memory_space<vmem>>, vector<128x16xbf16>
    %c0_1 = arith.constant 0 : index
    %c0_2 = arith.constant 0 : index
    %1 = vector.load %arg2[%c0_1, %c0_2] : memref<16x128xbf16, #tpu.memory_space<vmem>>, vector<16x128xbf16>
    %cst = arith.constant dense<0.000000e+00> : vector<128x128xf32>
    %2 = tpu.matmul %0, %1, %cst {dimension_numbers = #tpu.dot_dimension_numbers<[1], [0], [0], [1], [0, 0, 1, 1], [], []>} : vector<128x16xbf16>, vector<16x128xbf16>, vector<128x128xf32> -> vector<128x128xf32>
    %c0_3 = arith.constant 0 : index
    %c0_4 = arith.constant 0 : index
    %3 = vector.load %arg3[%c0_3, %c0_4] : memref<1x128xf32, #tpu.memory_space<vmem>>, vector<1x128xf32>
    %4 = vector.broadcast %3 : vector<1x128xf32> to vector<128x128xf32>
    %5 = arith.addf %2, %4 : vector<128x128xf32>
    %cst_5 = arith.constant 0.000000e+00 : f32
    %6 = vector.broadcast %cst_5 : f32 to vector<128x128xf32>
    %7 = arith.maximumf %5, %6 : vector<128x128xf32>
    %8 = arith.truncf %7 : vector<128x128xf32> to vector<128x128xbf16>
    %c0_6 = arith.constant 0 : index
    %c0_7 = arith.constant 0 : index
    %9 = vector.load %arg4[%c0_6, %c0_7] : memref<128x128xbf16, #tpu.memory_space<vmem>>, vector<128x128xbf16>
    %cst_8 = arith.constant dense<0.000000e+00> : vector<128x128xf32>
    %10 = tpu.matmul %8, %9, %cst_8 {dimension_numbers = #tpu.dot_dimension_numbers<[1], [0], [0], [1], [0, 0, 1, 1], [], []>} : vector<128x128xbf16>, vector<128x128xbf16>, vector<128x128xf32> -> vector<128x128xf32>
    %c0_9 = arith.constant 0 : index
    %c0_10 = arith.constant 0 : index
    %11 = vector.load %arg5[%c0_9, %c0_10] : memref<1x128xf32, #tpu.memory_space<vmem>>, vector<1x128xf32>
    %12 = vector.broadcast %11 : vector<1x128xf32> to vector<128x128xf32>
    %13 = arith.addf %10, %12 : vector<128x128xf32>
    %cst_11 = arith.constant 0.000000e+00 : f32
    %14 = vector.broadcast %cst_11 : f32 to vector<128x128xf32>
    %15 = arith.maximumf %13, %14 : vector<128x128xf32>
    %16 = arith.truncf %15 : vector<128x128xf32> to vector<128x128xbf16>
    %c0_12 = arith.constant 0 : index
    %c0_13 = arith.constant 0 : index
    %17 = vector.load %arg6[%c0_12, %c0_13] : memref<128x128xbf16, #tpu.memory_space<vmem>>, vector<128x128xbf16>
    %cst_14 = arith.constant dense<0.000000e+00> : vector<128x128xf32>
    %18 = tpu.matmul %16, %17, %cst_14 {dimension_numbers = #tpu.dot_dimension_numbers<[1], [0], [0], [1], [0, 0, 1, 1], [], []>} : vector<128x128xbf16>, vector<128x128xbf16>, vector<128x128xf32> -> vector<128x128xf32>
    %c0_15 = arith.constant 0 : index
    %c0_16 = arith.constant 0 : index
    %19 = vector.load %arg7[%c0_15, %c0_16] : memref<1x128xf32, #tpu.memory_space<vmem>>, vector<1x128xf32>
    %20 = vector.broadcast %19 : vector<1x128xf32> to vector<128x128xf32>
    %21 = arith.addf %18, %20 : vector<128x128xf32>
    %cst_17 = arith.constant 0.000000e+00 : f32
    %22 = vector.broadcast %cst_17 : f32 to vector<128x128xf32>
    %23 = arith.maximumf %21, %22 : vector<128x128xf32>
    %c0_18 = arith.constant 0 : index
    %c0_19 = arith.constant 0 : index
    %24 = vector.load %arg8[%c0_18, %c0_19] : memref<1x128xbf16, #tpu.memory_space<vmem>>, vector<1x128xbf16>
    %25 = arith.truncf %23 : vector<128x128xf32> to vector<128x128xbf16>
    %cst_20 = arith.constant dense<0.000000e+00> : vector<1x128xf32>
    %26 = tpu.matmul %24, %25, %cst_20 {dimension_numbers = #tpu.dot_dimension_numbers<[1], [1], [0], [0], [0, 0, 1, 0], [], []>} : vector<1x128xbf16>, vector<128x128xbf16>, vector<1x128xf32> -> vector<1x128xf32>
    %c0_21 = arith.constant 0 : index
    %c0_22 = arith.constant 0 : index
    %27 = vector.load %arg9[%c0_21, %c0_22] : memref<1x128xf32, #tpu.memory_space<vmem>>, vector<1x128xf32>
    tpu.vector_store %arg9[%c0_21, %c0_22], %26 {strides = array<i32>} : memref<1x128xf32, #tpu.memory_space<vmem>>, vector<1x128xf32>,
    return
  }
  func.func @transform_0(%arg0: i32) -> (i32, i32) {
    %c0_i32 = arith.constant 0 : i32
    %c0_i32_0 = arith.constant 0 : i32
    return %arg0, %c0_i32 : i32, i32
  }
  func.func @transform_1(%arg0: i32) -> (i32, i32) {
    %c0_i32 = arith.constant 0 : i32
    %c0_i32_0 = arith.constant 0 : i32
    %c0_i32_1 = arith.constant 0 : i32
    return %c0_i32, %c0_i32_0 : i32, i32
  }
  func.func @transform_2(%arg0: i32) -> (i32, i32) {
    %c0_i32 = arith.constant 0 : i32
    %c0_i32_0 = arith.constant 0 : i32
    %c0_i32_1 = arith.constant 0 : i32
    return %c0_i32, %c0_i32_0 : i32, i32
  }
  func.func @transform_3(%arg0: i32) -> (i32, i32) {
    %c0_i32 = arith.constant 0 : i32
    %c0_i32_0 = arith.constant 0 : i32
    %c0_i32_1 = arith.constant 0 : i32
    return %c0_i32, %c0_i32_0 : i32, i32
  }
  func.func @transform_4(%arg0: i32) -> (i32, i32) {
    %c0_i32 = arith.constant 0 : i32
    %c0_i32_0 = arith.constant 0 : i32
    %c0_i32_1 = arith.constant 0 : i32
    return %c0_i32, %c0_i32_0 : i32, i32
  }
  func.func @transform_5(%arg0: i32) -> (i32, i32) {
    %c0_i32 = arith.constant 0 : i32
    %c0_i32_0 = arith.constant 0 : i32
    %c0_i32_1 = arith.constant 0 : i32
    return %c0_i32, %c0_i32_0 : i32, i32
  }
  func.func @transform_6(%arg0: i32) -> (i32, i32) {
    %c0_i32 = arith.constant 0 : i32
    %c0_i32_0 = arith.constant 0 : i32
    %c0_i32_1 = arith.constant 0 : i32
    return %c0_i32, %c0_i32_0 : i32, i32
  }
  func.func @transform_7(%arg0: i32) -> (i32, i32) {
    %c0_i32 = arith.constant 0 : i32
    %c0_i32_0 = arith.constant 0 : i32
    %c0_i32_1 = arith.constant 0 : i32
    return %c0_i32, %c0_i32_0 : i32, i32
  }
  func.func @transform_8(%arg0: i32) -> (i32, i32) {
    %c0_i32 = arith.constant 0 : i32
    %c0_i32_0 = arith.constant 0 : i32
    return %c0_i32, %arg0 : i32, i32
  }
}

</mosaic_0001>

<llo_original>
// kernel: tpu_custom_call.1
$region0: #{tpu_custom_call.1}
  #allocation0 [shape = 'u32[]', space=smem, size = 0x4, offset = 0x4, fixed_abs, tag = 'smem constant byte address 0x4 - core index']
  #allocation1 [shape = 'u32[72,128]{1,0:T(1,128)}', space=vmem, size = 0x9000, scoped, tag = 'internal scratch']
  %s0 = inlined_call_operand.vmem [shape: bf16[128,16], index: 0, kind: input, shape index: {}]
  %s1 = inlined_call_operand.vmem [shape: bf16[16,128], index: 1, kind: input, shape index: {}]
  %s2 = inlined_call_operand.vmem [shape: f32[1,128], index: 2, kind: input, shape index: {}]
  %s3 = inlined_call_operand.vmem [shape: bf16[128,128], index: 3, kind: input, shape index: {}]
  %s4 = inlined_call_operand.vmem [shape: f32[1,128], index: 4, kind: input, shape index: {}]
  %s5 = inlined_call_operand.hbm [shape: bf16[128,128], index: 5, kind: input, shape index: {}]
  %s6 = inlined_call_operand.vmem [shape: f32[1,128], index: 6, kind: input, shape index: {}]
  %s7 = inlined_call_operand.vmem [shape: bf16[1,128], index: 7, kind: input, shape index: {}]
  %s8 = inlined_call_operand.hbm [shape: f32[1,128], index: 8, kind: output, shape index: {}]
  %s9 = sld [smem:[#allocation0]]
  $region46: #{tpu_custom_call.1} parent=0
    _
  %s11 = ssub.s32 1, %s9
  %s12 = scalar_select 0, %s11, %s9
  $region1: #{tpu_custom_call.1} parent=0
    #allocation2 [shape = 'u8[32768]{0}', space=vmem, size = 0x8000, scoped, tag = 'input window, operand 5, single buffered']
    #allocation3 [shape = 's32[1]{0}', space=sflag, size = 0x4, scoped, tag = 'scoped memory for tpu_custom_call.1']
    #allocation4 [shape = 's32[1]{0}', space=sflag, size = 0x4, scoped, tag = 'scoped memory for tpu_custom_call.1']
    #allocation5 [shape = 'u8[512]{0}', space=vmem, size = 0x400, scoped, tag = 'output window, operand 0, single buffered']
    %13 = vsyncpa [#allocation3], 0
    %14 = vsyncpa [#allocation4], 0
    // Predicated region
    $region2: #{tpu_custom_call.1} parent=1 // pred_check
      _
    $region3: #{tpu_custom_call.1} parent=1 // pred_check_branch
      %16 = sbr.rel (0) target = $region5
    $region4: #{tpu_custom_call.1} parent=1 // pred_region
      _
    $region5: #{tpu_custom_call.1} parent=1 // pred_fallthru
      _
    // Predicated region
    $region6: #{tpu_custom_call.1} parent=1 // pred_check
      _
    $region7: #{tpu_custom_call.1} parent=1 // pred_check_branch
      %18 = sbr.rel (0) target = $region9
    $region8: #{tpu_custom_call.1} parent=1 // pred_region
      _
    $region9: #{tpu_custom_call.1} parent=1 // pred_fallthru
      _
    // Predicated region
    $region10: #{tpu_custom_call.1} parent=1 // pred_check
      _
    $region11: #{tpu_custom_call.1} parent=1 // pred_check_branch
      %20 = sbr.rel (0) target = $region13
    $region12: #{tpu_custom_call.1} parent=1 // pred_region
      _
    $region13: #{tpu_custom_call.1} parent=1 // pred_fallthru
      _
    // Predicated region
    $region14: #{tpu_custom_call.1} parent=1 // pred_check
      _
    $region15: #{tpu_custom_call.1} parent=1 // pred_check_branch
      %22 = sbr.rel (0) target = $region17
    $region16: #{tpu_custom_call.1} parent=1 // pred_region
      _
    $region17: #{tpu_custom_call.1} parent=1 // pred_fallthru
      _
    // Predicated region
    $region18: #{tpu_custom_call.1} parent=1 // pred_check
      _
    $region19: #{tpu_custom_call.1} parent=1 // pred_check_branch
      %24 = sbr.rel (0) target = $region21
    $region20: #{tpu_custom_call.1} parent=1 // pred_region
      _
    $region21: #{tpu_custom_call.1} parent=1 // pred_fallthru
      _
    // Predicated region
    $region22: #{tpu_custom_call.1} parent=1 // pred_check
      _
    $region23: #{tpu_custom_call.1} parent=1 // pred_check_branch
      %26 = sbr.rel (0) target = $region25
    $region24: #{tpu_custom_call.1} parent=1 // pred_region
      %28 = vsyncadd [#allocation3], 0
      %s29 = sshll.u32 %s5, 4
      %s30 = int_to_ptr.hbm [resolvable:$true] %s29
      %s31 = sshll.u32 [#allocation2], 4
      %s32 = int_to_ptr.vmem [resolvable:$true] %s31
      %37 = dma.hbm_to_vmem [thread:$0]  %s30, 1024, %s32, [#allocation3], 64, 64, 4
    $region25: #{tpu_custom_call.1} parent=1 // pred_fallthru
      _
    // Predicated region
    $region26: #{tpu_custom_call.1} parent=1 // pred_check
      _
    $region27: #{tpu_custom_call.1} parent=1 // pred_check_branch
      %39 = sbr.rel (0) target = $region29
    $region28: #{tpu_custom_call.1} parent=1 // pred_region
      _
    $region29: #{tpu_custom_call.1} parent=1 // pred_fallthru
      _
    // Predicated region
    $region30: #{tpu_custom_call.1} parent=1 // pred_check
      _
    $region31: #{tpu_custom_call.1} parent=1 // pred_check_branch
      %41 = sbr.rel (0) target = $region33
    $region32: #{tpu_custom_call.1} parent=1 // pred_region
      _
    $region33: #{tpu_custom_call.1} parent=1 // pred_fallthru
      _
    // Predicated region
    $region34: #{tpu_custom_call.1} parent=1 // pred_check
      _
    $region35: #{tpu_custom_call.1} parent=1 // pred_check_branch
      %43 = sbr.rel (0) target = $region37
    $region36: #{tpu_custom_call.1} parent=1 // pred_region
      %45 = dma.done [#allocation3], 1024
    $region37: #{tpu_custom_call.1} parent=1 // pred_fallthru
      _
    %v47 = vld [vmem:[%s0] sm:$0xf]
    %v48 = vld [vmem:[%s0 + $0x4] sm:$0xf]
    %v49 = vld [vmem:[%s0 + $0x8] sm:$0xf]
    %v50 = vld [vmem:[%s0 + $0xc] sm:$0xf]
    %v51 = vld [vmem:[%s0 + $0x10] sm:$0xf]
    %v52 = vld [vmem:[%s0 + $0x14] sm:$0xf]
    %v53 = vld [vmem:[%s0 + $0x18] sm:$0xf]
    %v54 = vld [vmem:[%s0 + $0x1c] sm:$0xf]
    %v55 = vld [vmem:[%s0 + $0x20] sm:$0xf]
    %v56 = vld [vmem:[%s0 + $0x24] sm:$0xf]
    %v57 = vld [vmem:[%s0 + $0x28] sm:$0xf]
    %v58 = vld [vmem:[%s0 + $0x2c] sm:$0xf]
    %v59 = vld [vmem:[%s0 + $0x30] sm:$0xf]
    %v60 = vld [vmem:[%s0 + $0x34] sm:$0xf]
    %v61 = vld [vmem:[%s0 + $0x38] sm:$0xf]
    %v62 = vld [vmem:[%s0 + $0x3c] sm:$0xf]
    %v63 = vld [vmem:[%s1] sm:$0xf]
    %v64 = vld [vmem:[%s1 + $0x4] sm:$0xf]
    %v65 = vld [vmem:[%s2] sm:$0x1]
    %v67 = vperm.slane %v65, 0
    %v85 = vunpack.c.l.b16 %v47
    %v86 = vunpack.c.l.b16 %v48
    %v87 = vunpack.c.l.b16 %v49
    %v88 = vunpack.c.l.b16 %v50
    %v89 = vunpack.c.l.b16 %v51
    %v90 = vunpack.c.l.b16 %v52
    %v91 = vunpack.c.l.b16 %v53
    %v92 = vunpack.c.l.b16 %v54
    %v93 = vunpack.c.l.b16 %v55
    %v94 = vunpack.c.l.b16 %v56
    %v95 = vunpack.c.l.b16 %v57
    %v96 = vunpack.c.l.b16 %v58
    %v97 = vunpack.c.l.b16 %v59
    %v98 = vunpack.c.l.b16 %v60
    %v99 = vunpack.c.l.b16 %v61
    %v100 = vunpack.c.l.b16 %v62
    %v101 = vpack.c.b16 %v86, %v85
    %v102 = vpack.c.b16 %v88, %v87
    %v103 = vpack.c.b16 %v90, %v89
    %v104 = vpack.c.b16 %v92, %v91
    %v105 = vpack.c.b16 %v94, %v93
    %v106 = vpack.c.b16 %v96, %v95
    %v107 = vpack.c.b16 %v98, %v97
    %v108 = vpack.c.b16 %v100, %v99
    %v111 = vunpack.c.l.b16 %v63
    %v112 = vunpack.c.l.b16 %v64
    %v113 = vpack.c.b16 %v112, %v111
    %vm115 = vcmask 130048
    %v117 = vsel %vm115, %v101, 0
    %v120 = vsel %vm115, %v102, 0
    %v123 = vsel %vm115, %v103, 0
    %v126 = vsel %vm115, %v104, 0
    %v129 = vsel %vm115, %v105, 0
    %v132 = vsel %vm115, %v106, 0
    %v135 = vsel %vm115, %v107, 0
    %v138 = vsel %vm115, %v108, 0
    %140 = vmatpush.bf16.msra.mxu0 0
    %141 = vmatpush.bf16.msra.mxu0 0
    %142 = vmatpush.bf16.msra.mxu0 0
    %143 = vmatpush.bf16.msra.mxu0 0
    %144 = vmatpush.bf16.msra.mxu0 0
    %145 = vmatpush.bf16.msra.mxu0 0
    %146 = vmatpush.bf16.msra.mxu0 0
    %147 = vmatpush.bf16.msra.mxu0 %v113
    %148 = vmatmul.bf16.gmra.mxu0 %v117
    %v149 = vpop.f32.mrf.mxu0
    %v150 = vadd.f32 %v67, %v149
    %v151 = vpop.f32.mrf.mxu0
    %v152 = vadd.f32 %v67, %v151
    %153 = vmatmul.bf16.gmra.mxu0 %v120
    %v154 = vpop.f32.mrf.mxu0
    %v155 = vadd.f32 %v67, %v154
    %v156 = vpop.f32.mrf.mxu0
    %v157 = vadd.f32 %v67, %v156
    %158 = vmatmul.bf16.gmra.mxu0 %v123
    %v159 = vpop.f32.mrf.mxu0
    %v160 = vadd.f32 %v67, %v159
    %v161 = vpop.f32.mrf.mxu0
    %v162 = vadd.f32 %v67, %v161
    %163 = vmatmul.bf16.gmra.mxu0 %v126
    %v164 = vpop.f32.mrf.mxu0
    %v165 = vadd.f32 %v67, %v164
    %v166 = vpop.f32.mrf.mxu0
    %v167 = vadd.f32 %v67, %v166
    %168 = vmatmul.bf16.gmra.mxu0 %v129
    %v169 = vpop.f32.mrf.mxu0
    %v170 = vadd.f32 %v67, %v169
    %v171 = vpop.f32.mrf.mxu0
    %v172 = vadd.f32 %v67, %v171
    %173 = vmatmul.bf16.gmra.mxu0 %v132
    %v174 = vpop.f32.mrf.mxu0
    %v175 = vadd.f32 %v67, %v174
    %v176 = vpop.f32.mrf.mxu0
    %v177 = vadd.f32 %v67, %v176
    %178 = vmatmul.bf16.gmra.mxu0 %v135
    %v179 = vpop.f32.mrf.mxu0
    %v180 = vadd.f32 %v67, %v179
    %v181 = vpop.f32.mrf.mxu0
    %v182 = vadd.f32 %v67, %v181
    %183 = vmatmul.bf16.gmra.mxu0 %v138
    %v184 = vpop.f32.mrf.mxu0
    %v185 = vadd.f32 %v67, %v184
    %v186 = vpop.f32.mrf.mxu0
    %v187 = vadd.f32 %v67, %v186
    %188 = vdwg.mxu0
    %v189 = vmax.f32 %v150, 0.0
    %v190 = vmax.f32 %v152, 0.0
    %v191 = vmax.f32 %v155, 0.0
    %v192 = vmax.f32 %v157, 0.0
    %v193 = vmax.f32 %v160, 0.0
    %v194 = vmax.f32 %v162, 0.0
    %v195 = vmax.f32 %v165, 0.0
    %v196 = vmax.f32 %v167, 0.0
    %v197 = vmax.f32 %v170, 0.0
    %v198 = vmax.f32 %v172, 0.0
    %v199 = vmax.f32 %v175, 0.0
    %v200 = vmax.f32 %v177, 0.0
    %v201 = vmax.f32 %v180, 0.0
    %v202 = vmax.f32 %v182, 0.0
    %v203 = vmax.f32 %v185, 0.0
    %v204 = vmax.f32 %v187, 0.0
    %v205 = vpack.c.bf16 %v190, %v189
    %v206 = vpack.c.bf16 %v192, %v191
    %v207 = vpack.c.bf16 %v194, %v193
    %v208 = vpack.c.bf16 %v196, %v195
    %v209 = vpack.c.bf16 %v198, %v197
    %v210 = vpack.c.bf16 %v200, %v199
    %v211 = vpack.c.bf16 %v202, %v201
    %v212 = vpack.c.bf16 %v204, %v203
    %v213 = vld [vmem:[%s3] sm:$0xf]
    %v214 = vld [vmem:[%s3 + $0x4] sm:$0xf]
    %v215 = vld [vmem:[%s3 + $0x8] sm:$0xf]
    %v216 = vld [vmem:[%s3 + $0xc] sm:$0xf]
    %v217 = vld [vmem:[%s3 + $0x10] sm:$0xf]
    %v218 = vld [vmem:[%s3 + $0x14] sm:$0xf]
    %v219 = vld [vmem:[%s3 + $0x18] sm:$0xf]
    %v220 = vld [vmem:[%s3 + $0x1c] sm:$0xf]
    %v221 = vld [vmem:[%s3 + $0x20] sm:$0xf]
    %v222 = vld [vmem:[%s3 + $0x24] sm:$0xf]
    %v223 = vld [vmem:[%s3 + $0x28] sm:$0xf]
    %v224 = vld [vmem:[%s3 + $0x2c] sm:$0xf]
    %v225 = vld [vmem:[%s3 + $0x30] sm:$0xf]
    %v226 = vld [vmem:[%s3 + $0x34] sm:$0xf]
    %v227 = vld [vmem:[%s3 + $0x38] sm:$0xf]
    %v228 = vld [vmem:[%s3 + $0x3c] sm:$0xf]
    %v229 = vld [vmem:[%s4] sm:$0x1]
    %v231 = vperm.slane %v229, 0
    %v249 = vunpack.c.l.b16 %v213
    %v250 = vunpack.c.l.b16 %v214
    %v251 = vunpack.c.l.b16 %v215
    %v252 = vunpack.c.l.b16 %v216
    %v253 = vunpack.c.l.b16 %v217
    %v254 = vunpack.c.l.b16 %v218
    %v255 = vunpack.c.l.b16 %v219
    %v256 = vunpack.c.l.b16 %v220
    %v257 = vunpack.c.l.b16 %v221
    %v258 = vunpack.c.l.b16 %v222
    %v259 = vunpack.c.l.b16 %v223
    %v260 = vunpack.c.l.b16 %v224
    %v261 = vunpack.c.l.b16 %v225
    %v262 = vunpack.c.l.b16 %v226
    %v263 = vunpack.c.l.b16 %v227
    %v264 = vunpack.c.l.b16 %v228
    %v265 = vpack.c.b16 %v250, %v249
    %v266 = vpack.c.b16 %v252, %v251
    %v267 = vpack.c.b16 %v254, %v253
    %v268 = vpack.c.b16 %v256, %v255
    %v269 = vpack.c.b16 %v258, %v257
    %v270 = vpack.c.b16 %v260, %v259
    %v271 = vpack.c.b16 %v262, %v261
    %v272 = vpack.c.b16 %v264, %v263
    %281 = vmatpush.bf16.msra.mxu0 %v272
    %282 = vmatpush.bf16.msra.mxu0 %v271
    %283 = vmatpush.bf16.msra.mxu0 %v270
    %284 = vmatpush.bf16.msra.mxu0 %v269
    %285 = vmatpush.bf16.msra.mxu0 %v268
    %286 = vmatpush.bf16.msra.mxu0 %v267
    %287 = vmatpush.bf16.msra.mxu0 %v266
    %288 = vmatpush.bf16.msra.mxu0 %v265
    %289 = vmatmul.bf16.gmra.mxu0 %v205
    %v290 = vpop.f32.mrf.mxu0
    %v291 = vadd.f32 %v231, %v290
    %v292 = vpop.f32.mrf.mxu0
    %v293 = vadd.f32 %v231, %v292
    %294 = vmatmul.bf16.gmra.mxu0 %v206
    %v295 = vpop.f32.mrf.mxu0
    %v296 = vadd.f32 %v231, %v295
    %v297 = vpop.f32.mrf.mxu0
    %v298 = vadd.f32 %v231, %v297
    %299 = vmatmul.bf16.gmra.mxu0 %v207
    %v300 = vpop.f32.mrf.mxu0
    %v301 = vadd.f32 %v231, %v300
    %v302 = vpop.f32.mrf.mxu0
    %v303 = vadd.f32 %v231, %v302
    %304 = vmatmul.bf16.gmra.mxu0 %v208
    %v305 = vpop.f32.mrf.mxu0
    %v306 = vadd.f32 %v231, %v305
    %v307 = vpop.f32.mrf.mxu0
    %v308 = vadd.f32 %v231, %v307
    %309 = vmatmul.bf16.gmra.mxu0 %v209
    %v310 = vpop.f32.mrf.mxu0
    %v311 = vadd.f32 %v231, %v310
    %v312 = vpop.f32.mrf.mxu0
    %v313 = vadd.f32 %v231, %v312
    %314 = vmatmul.bf16.gmra.mxu0 %v210
    %v315 = vpop.f32.mrf.mxu0
    %v316 = vadd.f32 %v231, %v315
    %v317 = vpop.f32.mrf.mxu0
    %v318 = vadd.f32 %v231, %v317
    %319 = vmatmul.bf16.gmra.mxu0 %v211
    %v320 = vpop.f32.mrf.mxu0
    %v321 = vadd.f32 %v231, %v320
    %v322 = vpop.f32.mrf.mxu0
    %v323 = vadd.f32 %v231, %v322
    %324 = vmatmul.bf16.gmra.mxu0 %v212
    %v325 = vpop.f32.mrf.mxu0
    %v326 = vadd.f32 %v231, %v325
    %v327 = vpop.f32.mrf.mxu0
    %v328 = vadd.f32 %v231, %v327
    %329 = vdwg.mxu0
    %v330 = vmax.f32 %v291, 0.0
    %v331 = vmax.f32 %v293, 0.0
    %v332 = vmax.f32 %v296, 0.0
    %v333 = vmax.f32 %v298, 0.0
    %v334 = vmax.f32 %v301, 0.0
    %v335 = vmax.f32 %v303, 0.0
    %v336 = vmax.f32 %v306, 0.0
    %v337 = vmax.f32 %v308, 0.0
    %v338 = vmax.f32 %v311, 0.0
    %v339 = vmax.f32 %v313, 0.0
    %v340 = vmax.f32 %v316, 0.0
    %v341 = vmax.f32 %v318, 0.0
    %v342 = vmax.f32 %v321, 0.0
    %v343 = vmax.f32 %v323, 0.0
    %v344 = vmax.f32 %v326, 0.0
    %v345 = vmax.f32 %v328, 0.0
    %v346 = vpack.c.bf16 %v331, %v330
    %v347 = vpack.c.bf16 %v333, %v332
    %v348 = vpack.c.bf16 %v335, %v334
    %v349 = vpack.c.bf16 %v337, %v336
    %v350 = vpack.c.bf16 %v339, %v338
    %v351 = vpack.c.bf16 %v341, %v340
    %v352 = vpack.c.bf16 %v343, %v342
    %v353 = vpack.c.bf16 %v345, %v344
    %v354 = vld [vmem:[#allocation2] sm:$0xf]
    %v355 = vld [vmem:[#allocation2 + $0x4] sm:$0xf]
    %v356 = vld [vmem:[#allocation2 + $0x8] sm:$0xf]
    %v357 = vld [vmem:[#allocation2 + $0xc] sm:$0xf]
    %v358 = vld [vmem:[#allocation2 + $0x10] sm:$0xf]
    %v359 = vld [vmem:[#allocation2 + $0x14] sm:$0xf]
    %v360 = vld [vmem:[#allocation2 + $0x18] sm:$0xf]
    %v361 = vld [vmem:[#allocation2 + $0x1c] sm:$0xf]
    %v362 = vld [vmem:[#allocation2 + $0x20] sm:$0xf]
    %v363 = vld [vmem:[#allocation2 + $0x24] sm:$0xf]
    %v364 = vld [vmem:[#allocation2 + $0x28] sm:$0xf]
    %v365 = vld [vmem:[#allocation2 + $0x2c] sm:$0xf]
    %v366 = vld [vmem:[#allocation2 + $0x30] sm:$0xf]
    %v367 = vld [vmem:[#allocation2 + $0x34] sm:$0xf]
    %v368 = vld [vmem:[#allocation2 + $0x38] sm:$0xf]
    %v369 = vld [vmem:[#allocation2 + $0x3c] sm:$0xf]
    %v370 = vld [vmem:[%s6] sm:$0x1]
    %v372 = vperm.slane %v370, 0
    %v390 = vunpack.c.l.b16 %v354
    %v391 = vunpack.c.l.b16 %v355
    %v392 = vunpack.c.l.b16 %v356
    %v393 = vunpack.c.l.b16 %v357
    %v394 = vunpack.c.l.b16 %v358
    %v395 = vunpack.c.l.b16 %v359
    %v396 = vunpack.c.l.b16 %v360
    %v397 = vunpack.c.l.b16 %v361
    %v398 = vunpack.c.l.b16 %v362
    %v399 = vunpack.c.l.b16 %v363
    %v400 = vunpack.c.l.b16 %v364
    %v401 = vunpack.c.l.b16 %v365
    %v402 = vunpack.c.l.b16 %v366
    %v403 = vunpack.c.l.b16 %v367
    %v404 = vunpack.c.l.b16 %v368
    %v405 = vunpack.c.l.b16 %v369
    %v406 = vpack.c.b16 %v391, %v390
    %v407 = vpack.c.b16 %v393, %v392
    %v408 = vpack.c.b16 %v395, %v394
    %v409 = vpack.c.b16 %v397, %v396
    %v410 = vpack.c.b16 %v399, %v398
    %v411 = vpack.c.b16 %v401, %v400
    %v412 = vpack.c.b16 %v403, %v402
    %v413 = vpack.c.b16 %v405, %v404
    %422 = vmatpush.bf16.msra.mxu0 %v413
    %423 = vmatpush.bf16.msra.mxu0 %v412
    %424 = vmatpush.bf16.msra.mxu0 %v411
    %425 = vmatpush.bf16.msra.mxu0 %v410
    %426 = vmatpush.bf16.msra.mxu0 %v409
    %427 = vmatpush.bf16.msra.mxu0 %v408
    %428 = vmatpush.bf16.msra.mxu0 %v407
    %429 = vmatpush.bf16.msra.mxu0 %v406
    %430 = vmatmul.bf16.gmra.mxu0 %v346
    %v431 = vpop.f32.mrf.mxu0
    %v432 = vadd.f32 %v372, %v431
    %v433 = vpop.f32.mrf.mxu0
    %v434 = vadd.f32 %v372, %v433
    %435 = vmatmul.bf16.gmra.mxu0 %v347
    %v436 = vpop.f32.mrf.mxu0
    %v437 = vadd.f32 %v372, %v436
    %v438 = vpop.f32.mrf.mxu0
    %v439 = vadd.f32 %v372, %v438
    %440 = vmatmul.bf16.gmra.mxu0 %v348
    %v441 = vpop.f32.mrf.mxu0
    %v442 = vadd.f32 %v372, %v441
    %v443 = vpop.f32.mrf.mxu0
    %v444 = vadd.f32 %v372, %v443
    %445 = vmatmul.bf16.gmra.mxu0 %v349
    %v446 = vpop.f32.mrf.mxu0
    %v447 = vadd.f32 %v372, %v446
    %v448 = vpop.f32.mrf.mxu0
    %v449 = vadd.f32 %v372, %v448
    %450 = vmatmul.bf16.gmra.mxu0 %v350
    %v451 = vpop.f32.mrf.mxu0
    %v452 = vadd.f32 %v372, %v451
    %v453 = vpop.f32.mrf.mxu0
    %v454 = vadd.f32 %v372, %v453
    %455 = vmatmul.bf16.gmra.mxu0 %v351
    %v456 = vpop.f32.mrf.mxu0
    %v457 = vadd.f32 %v372, %v456
    %v458 = vpop.f32.mrf.mxu0
    %v459 = vadd.f32 %v372, %v458
    %460 = vmatmul.bf16.gmra.mxu0 %v352
    %v461 = vpop.f32.mrf.mxu0
    %v462 = vadd.f32 %v372, %v461
    %v463 = vpop.f32.mrf.mxu0
    %v464 = vadd.f32 %v372, %v463
    %465 = vmatmul.bf16.gmra.mxu0 %v353
    %v466 = vpop.f32.mrf.mxu0
    %v467 = vadd.f32 %v372, %v466
    %v468 = vpop.f32.mrf.mxu0
    %v469 = vadd.f32 %v372, %v468
    %470 = vdwg.mxu0
    %v471 = vmax.f32 %v432, 0.0
    %v472 = vmax.f32 %v434, 0.0
    %v473 = vmax.f32 %v437, 0.0
    %v474 = vmax.f32 %v439, 0.0
    %v475 = vmax.f32 %v442, 0.0
    %v476 = vmax.f32 %v444, 0.0
    %v477 = vmax.f32 %v447, 0.0
    %v478 = vmax.f32 %v449, 0.0
    %v479 = vmax.f32 %v452, 0.0
    %v480 = vmax.f32 %v454, 0.0
    %v481 = vmax.f32 %v457, 0.0
    %v482 = vmax.f32 %v459, 0.0
    %v483 = vmax.f32 %v462, 0.0
    %v484 = vmax.f32 %v464, 0.0
    %v485 = vmax.f32 %v467, 0.0
    %v486 = vmax.f32 %v469, 0.0
    %v487 = vld [vmem:[%s7] sm:$0x1]
    %v488 = vpack.c.bf16 %v472, %v471
    %v489 = vpack.c.bf16 %v474, %v473
    %v490 = vpack.c.bf16 %v476, %v475
    %v491 = vpack.c.bf16 %v478, %v477
    %v492 = vpack.c.bf16 %v480, %v479
    %v493 = vpack.c.bf16 %v482, %v481
    %v494 = vpack.c.bf16 %v484, %v483
    %v495 = vpack.c.bf16 %v486, %v485
    %496 = vmatpush.bf16.xpose.msra.mxu0 %v495
    %497 = vmatpush.bf16.xpose.msra.mxu0 %v494
    %498 = vmatpush.bf16.xpose.msra.mxu0 %v493
    %499 = vmatpush.bf16.xpose.msra.mxu0 %v492
    %500 = vmatpush.bf16.xpose.msra.mxu0 %v491
    %501 = vmatpush.bf16.xpose.msra.mxu0 %v490
    %502 = vmatpush.bf16.xpose.msra.mxu0 %v489
    %503 = vmatpush.bf16.xpose.msra.mxu0 %v488
    %504 = vmatmul.bf16.gmra.mxu0 %v487
    %v505 = vpop.f32.mrf.mxu0
    %v506 = vadd.f32 0.0, %v505
    %v507 = vpop.f32.mrf.mxu0
    %508 = vdwg.mxu0
    %509 = vst [vmem:[#allocation5] sm:$0x1] %v506
    // Predicated region
    $region38: #{tpu_custom_call.1} parent=1 // pred_check
      _
    $region39: #{tpu_custom_call.1} parent=1 // pred_check_branch
      %511 = sbr.rel (0) target = $region41
    $region40: #{tpu_custom_call.1} parent=1 // pred_region
      %513 = vsyncadd [#allocation4], 0
      %s515 = sshll.u32 [#allocation5], 4
      %s516 = int_to_ptr.vmem [resolvable:$true] %s515
      %s517 = sshll.u32 %s8, 4
      %s518 = int_to_ptr.hbm [resolvable:$true] %s517
      %520 = dma.vmem_to_hbm [thread:$0]  %s516, 16, %s518, [#allocation4]
    $region41: #{tpu_custom_call.1} parent=1 // pred_fallthru
      _
    // Predicated region
    $region42: #{tpu_custom_call.1} parent=1 // pred_check
      _
    $region43: #{tpu_custom_call.1} parent=1 // pred_check_branch
      %522 = sbr.rel (0) target = $region45
    $region44: #{tpu_custom_call.1} parent=1 // pred_region
      %524 = dma.done [#allocation4], 16
    $region45: #{tpu_custom_call.1} parent=1 // pred_fallthru
      _
    %525 = vsyncpa [#allocation3], 1
    %526 = vsyncpa [#allocation4], 1

</llo_original>
